<compile_context>
chip_gen: v5e
topology: v5e:2x2
jax: 0.10.0
libtpu: 0.0.40
codegen_flags: <defaults>
</compile_context>

<pallas_src>
import jax
import jax.numpy as jnp
from jax.experimental import pallas as pl
from jax.experimental.pallas import tpu as pltpu

IN_FEATURES = 28 * 28   # 784
HIDDEN1 = 32            # global `n = 32` in the reference script
HIDDEN2 = 512
OUT_FEATURES = 10

HIDDEN1_PAD = 128       # pad 32 -> 128 lanes (lane-dense intermediate)
OUT_PAD = 128           # pad 10 -> 128 lanes (lane-dense output store)
TILE_B_MAX = 1024       # bf16 x tile = 1.6 MB; double-buffered fits v7x VMEM easily


def _round_up(x, m):
    return (x + m - 1) // m * m


def mlp_kernel(x_ref, w1_ref, b1_ref, w2_ref, b2_ref, w3_ref, b3_ref, o_ref):
    # x (TILE_B, 784) bf16; weights bf16; biases f32; MXU accumulates in f32.
    h1 = jnp.dot(x_ref[...], w1_ref[...], preferred_element_type=jnp.float32)
    h1 = jnp.maximum(h1 + b1_ref[...], 0.0)            # bias + ReLU in f32
    h2 = jnp.dot(h1.astype(jnp.bfloat16), w2_ref[...],
                 preferred_element_type=jnp.float32)
    h2 = jnp.maximum(h2 + b2_ref[...], 0.0)
    o_ref[...] = (jnp.dot(h2.astype(jnp.bfloat16), w3_ref[...],
                          preferred_element_type=jnp.float32)
                  + b3_ref[...])                        # f32 logits, no extra cast


def neural_network_forward(x_nchw, params):
    """x_nchw: (B, 1, 28, 28) float32. params from prepare_params().
    Returns logits (B, 10) float32."""
    w1, b1, w2, b2, w3, b3 = params
    B = x_nchw.shape[0]
    x_flat = x_nchw.reshape(B, -1).astype(jnp.bfloat16)   # nn.Flatten + bf16 feed

    tile_b = min(TILE_B_MAX, _round_up(B, 8))
    b_pad = _round_up(B, tile_b)
    if b_pad != B:
        x_flat = jnp.pad(x_flat, ((0, b_pad - B), (0, 0)))

    full = lambda i: (0, 0)   # weights/biases: same block every step -> VMEM-resident

    logits_pad = pl.pallas_call(
        mlp_kernel,
        out_shape=jax.ShapeDtypeStruct((b_pad, OUT_PAD), jnp.float32),
        grid=(b_pad // tile_b,),
        in_specs=[
            pl.BlockSpec((tile_b, IN_FEATURES), lambda i: (i, 0)),   # x tile
            pl.BlockSpec((IN_FEATURES, HIDDEN1_PAD), full),          # W1
            pl.BlockSpec((1, HIDDEN1_PAD), full),                    # b1
            pl.BlockSpec((HIDDEN1_PAD, HIDDEN2), full),              # W2
            pl.BlockSpec((1, HIDDEN2), full),                        # b2
            pl.BlockSpec((HIDDEN2, OUT_PAD), full),                  # W3
            pl.BlockSpec((1, OUT_PAD), full),                        # b3
        ],
        out_specs=pl.BlockSpec((tile_b, OUT_PAD), lambda i: (i, 0)),
        compiler_params=pltpu.CompilerParams(
            dimension_semantics=("parallel",)),
    )(x_flat, w1, b1, w2, b2, w3, b3)

    return logits_pad[:B, :OUT_FEATURES]


def init_params(key):
    """PyTorch nn.Linear-style init (uniform ±1/sqrt(fan_in)), weights stored (in, out)."""
    def linear(key, fan_in, fan_out):
        kw, kb = jax.random.split(key)
        bound = 1.0 / jnp.sqrt(float(fan_in))
        w = jax.random.uniform(kw, (fan_in, fan_out), jnp.float32, -bound, bound)
        b = jax.random.uniform(kb, (1, fan_out), jnp.float32, -bound, bound)
        return w, b

    k1, k2, k3 = jax.random.split(key, 3)
    w1, b1 = linear(k1, IN_FEATURES, HIDDEN1)
    w2, b2 = linear(k2, HIDDEN1, HIDDEN2)
    w3, b3 = linear(k3, HIDDEN2, OUT_FEATURES)
    return (w1, b1, w2, b2, w3, b3)


def prepare_params(params):
    """Zero-pad narrow dims to lane width (exact math) and cast weights to bf16."""
    w1, b1, w2, b2, w3, b3 = params
    w1p = jnp.pad(w1, ((0, 0), (0, HIDDEN1_PAD - HIDDEN1))).astype(jnp.bfloat16)
    b1p = jnp.pad(b1, ((0, 0), (0, HIDDEN1_PAD - HIDDEN1)))                  # f32
    w2p = jnp.pad(w2, ((0, HIDDEN1_PAD - HIDDEN1), (0, 0))).astype(jnp.bfloat16)
    b2p = b2                                                                 # f32, already lane-dense
    w3p = jnp.pad(w3, ((0, 0), (0, OUT_PAD - OUT_FEATURES))).astype(jnp.bfloat16)
    b3p = jnp.pad(b3, ((0, 0), (0, OUT_PAD - OUT_FEATURES)))                 # f32
    return (w1p, b1p, w2p, b2p, w3p, b3p)


if __name__ == "__main__":
    key = jax.random.PRNGKey(0)
    k_params, k_input = jax.random.split(key)

    params = prepare_params(init_params(k_params))
    # Small MNIST-like batch: (B, C, H, W) = (8, 1, 28, 28)
    x = jax.random.normal(k_input, (8, 1, 28, 28), jnp.float32)

    logits = jax.jit(neural_network_forward)(x, params)
    jax.block_until_ready(logits)

    assert logits.shape == (8, OUT_FEATURES), logits.shape
    assert logits.dtype == jnp.float32, logits.dtype
    print("KERNEL_OK")
</pallas_src>

<mosaic_0001>
module attributes {stable_mosaic.version = 11 : i64} {
  func.func @mlp_kernel(%arg0: i32, %arg1: memref<8x784xbf16, #tpu.memory_space<vmem>>, %arg2: memref<784x128xbf16, #tpu.memory_space<vmem>>, %arg3: memref<1x128xf32, #tpu.memory_space<vmem>>, %arg4: memref<128x512xbf16, #tpu.memory_space<vmem>>, %arg5: memref<1x512xf32, #tpu.memory_space<vmem>>, %arg6: memref<512x128xbf16, #tpu.memory_space<vmem>>, %arg7: memref<1x128xf32, #tpu.memory_space<vmem>>, %arg8: memref<8x128xf32, #tpu.memory_space<vmem>>) attributes {dimension_semantics = [#tpu.dimension_semantics<parallel>], iteration_bounds = array<i64: 1>, scalar_prefetch = 0 : i64, scratch_operands = 0 : i64, tpu.core_type = #tpu.core_type<tc>, window_params = [{transform_indices = @transform_0, window_bounds = array<i64: 8, 784>}, {pipeline_mode = #tpu.pipeline_mode<synchronous>, transform_indices = @transform_1, window_bounds = array<i64: 784, 128>}, {pipeline_mode = #tpu.pipeline_mode<synchronous>, transform_indices = @transform_2, window_bounds = array<i64: 1, 128>}, {pipeline_mode = #tpu.pipeline_mode<synchronous>, transform_indices = @transform_3, window_bounds = array<i64: 128, 512>}, {pipeline_mode = #tpu.pipeline_mode<synchronous>, transform_indices = @transform_4, window_bounds = array<i64: 1, 512>}, {pipeline_mode = #tpu.pipeline_mode<synchronous>, transform_indices = @transform_5, window_bounds = array<i64: 512, 128>}, {pipeline_mode = #tpu.pipeline_mode<synchronous>, transform_indices = @transform_6, window_bounds = array<i64: 1, 128>}, {transform_indices = @transform_7, window_bounds = array<i64: 8, 128>}]} {
    %c0 = arith.constant 0 : index
    %c0_0 = arith.constant 0 : index
    %0 = vector.load %arg1[%c0, %c0_0] : memref<8x784xbf16, #tpu.memory_space<vmem>>, vector<8x784xbf16>
    %c0_1 = arith.constant 0 : index
    %c0_2 = arith.constant 0 : index
    %1 = vector.load %arg2[%c0_1, %c0_2] : memref<784x128xbf16, #tpu.memory_space<vmem>>, vector<784x128xbf16>
    %cst = arith.constant dense<0.000000e+00> : vector<8x128xf32>
    %2 = tpu.matmul %0, %1, %cst {dimension_numbers = #tpu.dot_dimension_numbers<[1], [0], [0], [1], [0, 0, 1, 1], [], []>} : vector<8x784xbf16>, vector<784x128xbf16>, vector<8x128xf32> -> vector<8x128xf32>
    %c0_3 = arith.constant 0 : index
    %c0_4 = arith.constant 0 : index
    %3 = vector.load %arg3[%c0_3, %c0_4] : memref<1x128xf32, #tpu.memory_space<vmem>>, vector<1x128xf32>
    %4 = vector.broadcast %3 : vector<1x128xf32> to vector<8x128xf32>
    %5 = arith.addf %2, %4 : vector<8x128xf32>
    %cst_5 = arith.constant 0.000000e+00 : f32
    %6 = vector.broadcast %cst_5 : f32 to vector<8x128xf32>
    %7 = arith.maximumf %5, %6 : vector<8x128xf32>
    %8 = arith.truncf %7 : vector<8x128xf32> to vector<8x128xbf16>
    %c0_6 = arith.constant 0 : index
    %c0_7 = arith.constant 0 : index
    %9 = vector.load %arg4[%c0_6, %c0_7] : memref<128x512xbf16, #tpu.memory_space<vmem>>, vector<128x512xbf16>
    %cst_8 = arith.constant dense<0.000000e+00> : vector<8x512xf32>
    %10 = tpu.matmul %8, %9, %cst_8 {dimension_numbers = #tpu.dot_dimension_numbers<[1], [0], [0], [1], [0, 0, 1, 1], [], []>} : vector<8x128xbf16>, vector<128x512xbf16>, vector<8x512xf32> -> vector<8x512xf32>
    %c0_9 = arith.constant 0 : index
    %c0_10 = arith.constant 0 : index
    %11 = vector.load %arg5[%c0_9, %c0_10] : memref<1x512xf32, #tpu.memory_space<vmem>>, vector<1x512xf32>
    %12 = vector.broadcast %11 : vector<1x512xf32> to vector<8x512xf32>
    %13 = arith.addf %10, %12 : vector<8x512xf32>
    %cst_11 = arith.constant 0.000000e+00 : f32
    %14 = vector.broadcast %cst_11 : f32 to vector<8x512xf32>
    %15 = arith.maximumf %13, %14 : vector<8x512xf32>
    %16 = arith.truncf %15 : vector<8x512xf32> to vector<8x512xbf16>
    %c0_12 = arith.constant 0 : index
    %c0_13 = arith.constant 0 : index
    %17 = vector.load %arg6[%c0_12, %c0_13] : memref<512x128xbf16, #tpu.memory_space<vmem>>, vector<512x128xbf16>
    %cst_14 = arith.constant dense<0.000000e+00> : vector<8x128xf32>
    %18 = tpu.matmul %16, %17, %cst_14 {dimension_numbers = #tpu.dot_dimension_numbers<[1], [0], [0], [1], [0, 0, 1, 1], [], []>} : vector<8x512xbf16>, vector<512x128xbf16>, vector<8x128xf32> -> vector<8x128xf32>
    %c0_15 = arith.constant 0 : index
    %c0_16 = arith.constant 0 : index
    %19 = vector.load %arg7[%c0_15, %c0_16] : memref<1x128xf32, #tpu.memory_space<vmem>>, vector<1x128xf32>
    %20 = vector.broadcast %19 : vector<1x128xf32> to vector<8x128xf32>
    %21 = arith.addf %18, %20 : vector<8x128xf32>
    %c0_17 = arith.constant 0 : index
    %c0_18 = arith.constant 0 : index
    %22 = vector.load %arg8[%c0_17, %c0_18] : memref<8x128xf32, #tpu.memory_space<vmem>>, vector<8x128xf32>
    tpu.vector_store %arg8[%c0_17, %c0_18], %21 {strides = array<i32>} : memref<8x128xf32, #tpu.memory_space<vmem>>, vector<8x128xf32>,
    return
  }
  func.func @transform_0(%arg0: i32) -> (i32, i32) {
    %c0_i32 = arith.constant 0 : i32
    %c0_i32_0 = arith.constant 0 : i32
    return %arg0, %c0_i32 : i32, i32
  }
  func.func @transform_1(%arg0: i32) -> (i32, i32) {
    %c0_i32 = arith.constant 0 : i32
    %c0_i32_0 = arith.constant 0 : i32
    %c0_i32_1 = arith.constant 0 : i32
    return %c0_i32, %c0_i32_0 : i32, i32
  }
  func.func @transform_2(%arg0: i32) -> (i32, i32) {
    %c0_i32 = arith.constant 0 : i32
    %c0_i32_0 = arith.constant 0 : i32
    %c0_i32_1 = arith.constant 0 : i32
    return %c0_i32, %c0_i32_0 : i32, i32
  }
  func.func @transform_3(%arg0: i32) -> (i32, i32) {
    %c0_i32 = arith.constant 0 : i32
    %c0_i32_0 = arith.constant 0 : i32
    %c0_i32_1 = arith.constant 0 : i32
    return %c0_i32, %c0_i32_0 : i32, i32
  }
  func.func @transform_4(%arg0: i32) -> (i32, i32) {
    %c0_i32 = arith.constant 0 : i32
    %c0_i32_0 = arith.constant 0 : i32
    %c0_i32_1 = arith.constant 0 : i32
    return %c0_i32, %c0_i32_0 : i32, i32
  }
  func.func @transform_5(%arg0: i32) -> (i32, i32) {
    %c0_i32 = arith.constant 0 : i32
    %c0_i32_0 = arith.constant 0 : i32
    %c0_i32_1 = arith.constant 0 : i32
    return %c0_i32, %c0_i32_0 : i32, i32
  }
  func.func @transform_6(%arg0: i32) -> (i32, i32) {
    %c0_i32 = arith.constant 0 : i32
    %c0_i32_0 = arith.constant 0 : i32
    %c0_i32_1 = arith.constant 0 : i32
    return %c0_i32, %c0_i32_0 : i32, i32
  }
  func.func @transform_7(%arg0: i32) -> (i32, i32) {
    %c0_i32 = arith.constant 0 : i32
    %c0_i32_0 = arith.constant 0 : i32
    return %arg0, %c0_i32 : i32, i32
  }
}

</mosaic_0001>

<llo_original>
// kernel: neural_network_forward.1
$region0: #{neural_network_forward.1}
  #allocation0 [shape = 'u32[]', space=smem, size = 0x4, offset = 0x4, fixed_abs, tag = 'smem constant byte address 0x4 - core index']
  #allocation1 [shape = 'u32[72,128]{1,0:T(1,128)}', space=vmem, size = 0x9000, scoped, tag = 'internal scratch']
  %s0 = inlined_call_operand.vmem [shape: bf16[8,784], index: 0, kind: input, shape index: {}]
  %s1 = inlined_call_operand.vmem [shape: bf16[784,128], index: 1, kind: input, shape index: {}]
  %s2 = inlined_call_operand.vmem [shape: f32[1,128], index: 2, kind: input, shape index: {}]
  %s3 = inlined_call_operand.hbm [shape: bf16[128,512], index: 3, kind: input, shape index: {}]
  %s4 = inlined_call_operand.vmem [shape: f32[1,512], index: 4, kind: input, shape index: {}]
  %s5 = inlined_call_operand.hbm [shape: bf16[512,128], index: 5, kind: input, shape index: {}]
  %s6 = inlined_call_operand.vmem [shape: f32[1,128], index: 6, kind: input, shape index: {}]
  %s7 = inlined_call_operand.hbm [shape: f32[8,128], index: 7, kind: output, shape index: {}]
  %s8 = sld [smem:[#allocation0]]
  $region46: #{neural_network_forward.1} parent=0
    _
  %s10 = ssub.s32 1, %s8
  %s11 = scalar_select 0, %s10, %s8
  $region1: #{neural_network_forward.1} parent=0
    #allocation2 [shape = 'u8[131072]{0}', space=vmem, size = 0x20000, scoped, tag = 'input window, operand 3, single buffered']
    #allocation3 [shape = 's32[1]{0}', space=sflag, size = 0x4, scoped, tag = 'scoped memory for neural_network_forward.1']
    #allocation4 [shape = 's32[1]{0}', space=sflag, size = 0x4, scoped, tag = 'scoped memory for neural_network_forward.1']
    #allocation5 [shape = 'u8[131072]{0}', space=vmem, size = 0x20000, scoped, tag = 'input window, operand 5, single buffered']
    #allocation6 [shape = 's32[1]{0}', space=sflag, size = 0x4, scoped, tag = 'scoped memory for neural_network_forward.1']
    #allocation7 [shape = 'u8[4096]{0}', space=vmem, size = 0x1000, scoped, tag = 'output window, operand 0, single buffered']
    %12 = vsyncpa [#allocation3], 0
    %13 = vsyncpa [#allocation6], 0
    %14 = vsyncpa [#allocation4], 0
    // Predicated region
    $region2: #{neural_network_forward.1} parent=1 // pred_check
      _
    $region3: #{neural_network_forward.1} parent=1 // pred_check_branch
      %16 = sbr.rel (0) target = $region5
    $region4: #{neural_network_forward.1} parent=1 // pred_region
      _
    $region5: #{neural_network_forward.1} parent=1 // pred_fallthru
      _
    // Predicated region
    $region6: #{neural_network_forward.1} parent=1 // pred_check
      _
    $region7: #{neural_network_forward.1} parent=1 // pred_check_branch
      %18 = sbr.rel (0) target = $region9
    $region8: #{neural_network_forward.1} parent=1 // pred_region
      _
    $region9: #{neural_network_forward.1} parent=1 // pred_fallthru
      _
    // Predicated region
    $region10: #{neural_network_forward.1} parent=1 // pred_check
      _
    $region11: #{neural_network_forward.1} parent=1 // pred_check_branch
      %20 = sbr.rel (0) target = $region13
    $region12: #{neural_network_forward.1} parent=1 // pred_region
      _
    $region13: #{neural_network_forward.1} parent=1 // pred_fallthru
      _
    // Predicated region
    $region14: #{neural_network_forward.1} parent=1 // pred_check
      _
    $region15: #{neural_network_forward.1} parent=1 // pred_check_branch
      %22 = sbr.rel (0) target = $region17
    $region16: #{neural_network_forward.1} parent=1 // pred_region
      %24 = vsyncadd [#allocation3], 0
      %s25 = sshll.u32 %s3, 4
      %s26 = int_to_ptr.hbm [resolvable:$true] %s25
      %s27 = sshll.u32 [#allocation2], 4
      %s28 = int_to_ptr.vmem [resolvable:$true] %s27
      %33 = dma.hbm_to_vmem [thread:$0]  %s26, 4096, %s28, [#allocation3], 256, 256, 16
    $region17: #{neural_network_forward.1} parent=1 // pred_fallthru
      _
    // Predicated region
    $region18: #{neural_network_forward.1} parent=1 // pred_check
      _
    $region19: #{neural_network_forward.1} parent=1 // pred_check_branch
      %35 = sbr.rel (0) target = $region21
    $region20: #{neural_network_forward.1} parent=1 // pred_region
      _
    $region21: #{neural_network_forward.1} parent=1 // pred_fallthru
      _
    // Predicated region
    $region22: #{neural_network_forward.1} parent=1 // pred_check
      _
    $region23: #{neural_network_forward.1} parent=1 // pred_check_branch
      %37 = sbr.rel (0) target = $region25
    $region24: #{neural_network_forward.1} parent=1 // pred_region
      %39 = vsyncadd [#allocation6], 0
      %s40 = sshll.u32 %s5, 4
      %s41 = int_to_ptr.hbm [resolvable:$true] %s40
      %s42 = sshll.u32 [#allocation5], 4
      %s43 = int_to_ptr.vmem [resolvable:$true] %s42
      %48 = dma.hbm_to_vmem [thread:$0]  %s41, 4096, %s43, [#allocation6], 64, 64, 4
    $region25: #{neural_network_forward.1} parent=1 // pred_fallthru
      _
    // Predicated region
    $region26: #{neural_network_forward.1} parent=1 // pred_check
      _
    $region27: #{neural_network_forward.1} parent=1 // pred_check_branch
      %50 = sbr.rel (0) target = $region29
    $region28: #{neural_network_forward.1} parent=1 // pred_region
      _
    $region29: #{neural_network_forward.1} parent=1 // pred_fallthru
      _
    // Predicated region
    $region30: #{neural_network_forward.1} parent=1 // pred_check
      _
    $region31: #{neural_network_forward.1} parent=1 // pred_check_branch
      %52 = sbr.rel (0) target = $region33
    $region32: #{neural_network_forward.1} parent=1 // pred_region
      %54 = dma.done [#allocation3], 4096
    $region33: #{neural_network_forward.1} parent=1 // pred_fallthru
      _
    // Predicated region
    $region34: #{neural_network_forward.1} parent=1 // pred_check
      _
    $region35: #{neural_network_forward.1} parent=1 // pred_check_branch
      %56 = sbr.rel (0) target = $region37
    $region36: #{neural_network_forward.1} parent=1 // pred_region
      %58 = dma.done [#allocation6], 4096
    $region37: #{neural_network_forward.1} parent=1 // pred_fallthru
      _
    %v60 = vld [vmem:[%s0] sm:$0xff]
    %v61 = vld [vmem:[%s0 + $0x8] sm:$0xff]
    %v62 = vld [vmem:[%s0 + $0x10] sm:$0xff]
    %v63 = vld [vmem:[%s0 + $0x18] sm:$0xf]
    %v64 = vld [vmem:[%s1] sm:$0xf]
    %v65 = vld [vmem:[%s1 + $0x4] sm:$0xf]
    %v66 = vld [vmem:[%s1 + $0x8] sm:$0xf]
    %v67 = vld [vmem:[%s1 + $0xc] sm:$0xf]
    %v68 = vld [vmem:[%s1 + $0x10] sm:$0xf]
    %v69 = vld [vmem:[%s1 + $0x14] sm:$0xf]
    %v70 = vld [vmem:[%s1 + $0x18] sm:$0xf]
    %v71 = vld [vmem:[%s1 + $0x1c] sm:$0xf]
    %v72 = vld [vmem:[%s1 + $0x20] sm:$0xf]
    %v73 = vld [vmem:[%s1 + $0x24] sm:$0xf]
    %v74 = vld [vmem:[%s1 + $0x28] sm:$0xf]
    %v75 = vld [vmem:[%s1 + $0x2c] sm:$0xf]
    %v76 = vld [vmem:[%s1 + $0x30] sm:$0xf]
    %v77 = vld [vmem:[%s1 + $0x34] sm:$0xf]
    %v78 = vld [vmem:[%s1 + $0x38] sm:$0xf]
    %v79 = vld [vmem:[%s1 + $0x3c] sm:$0xf]
    %v80 = vld [vmem:[%s1 + $0x40] sm:$0xf]
    %v81 = vld [vmem:[%s1 + $0x44] sm:$0xf]
    %v82 = vld [vmem:[%s1 + $0x48] sm:$0xf]
    %v83 = vld [vmem:[%s1 + $0x4c] sm:$0xf]
    %v84 = vld [vmem:[%s1 + $0x50] sm:$0xf]
    %v85 = vld [vmem:[%s1 + $0x54] sm:$0xf]
    %v86 = vld [vmem:[%s1 + $0x58] sm:$0xf]
    %v87 = vld [vmem:[%s1 + $0x5c] sm:$0xf]
    %v88 = vld [vmem:[%s1 + $0x60] sm:$0xf]
    %v89 = vld [vmem:[%s1 + $0x64] sm:$0xf]
    %v90 = vld [vmem:[%s1 + $0x68] sm:$0xf]
    %v91 = vld [vmem:[%s1 + $0x6c] sm:$0xf]
    %v92 = vld [vmem:[%s1 + $0x70] sm:$0xf]
    %v93 = vld [vmem:[%s1 + $0x74] sm:$0xf]
    %v94 = vld [vmem:[%s1 + $0x78] sm:$0xf]
    %v95 = vld [vmem:[%s1 + $0x7c] sm:$0xf]
    %v96 = vld [vmem:[%s1 + $0x80] sm:$0xf]
    %v97 = vld [vmem:[%s1 + $0x84] sm:$0xf]
    %v98 = vld [vmem:[%s1 + $0x88] sm:$0xf]
    %v99 = vld [vmem:[%s1 + $0x8c] sm:$0xf]
    %v100 = vld [vmem:[%s1 + $0x90] sm:$0xf]
    %v101 = vld [vmem:[%s1 + $0x94] sm:$0xf]
    %v102 = vld [vmem:[%s1 + $0x98] sm:$0xf]
    %v103 = vld [vmem:[%s1 + $0x9c] sm:$0xf]
    %v104 = vld [vmem:[%s1 + $0xa0] sm:$0xf]
    %v105 = vld [vmem:[%s1 + $0xa4] sm:$0xf]
    %v106 = vld [vmem:[%s1 + $0xa8] sm:$0xf]
    %v107 = vld [vmem:[%s1 + $0xac] sm:$0xf]
    %v108 = vld [vmem:[%s1 + $0xb0] sm:$0xf]
    %v109 = vld [vmem:[%s1 + $0xb4] sm:$0xf]
    %v110 = vld [vmem:[%s1 + $0xb8] sm:$0xf]
    %v111 = vld [vmem:[%s1 + $0xbc] sm:$0xf]
    %v112 = vld [vmem:[%s1 + $0xc0] sm:$0xf]
    %v113 = vld [vmem:[%s1 + $0xc4] sm:$0xf]
    %v114 = vld [vmem:[%s1 + $0xc8] sm:$0xf]
    %v115 = vld [vmem:[%s1 + $0xcc] sm:$0xf]
    %v116 = vld [vmem:[%s1 + $0xd0] sm:$0xf]
    %v117 = vld [vmem:[%s1 + $0xd4] sm:$0xf]
    %v118 = vld [vmem:[%s1 + $0xd8] sm:$0xf]
    %v119 = vld [vmem:[%s1 + $0xdc] sm:$0xf]
    %v120 = vld [vmem:[%s1 + $0xe0] sm:$0xf]
    %v121 = vld [vmem:[%s1 + $0xe4] sm:$0xf]
    %v122 = vld [vmem:[%s1 + $0xe8] sm:$0xf]
    %v123 = vld [vmem:[%s1 + $0xec] sm:$0xf]
    %v124 = vld [vmem:[%s1 + $0xf0] sm:$0xf]
    %v125 = vld [vmem:[%s1 + $0xf4] sm:$0xf]
    %v126 = vld [vmem:[%s1 + $0xf8] sm:$0xf]
    %v127 = vld [vmem:[%s1 + $0xfc] sm:$0xf]
    %v128 = vld [vmem:[%s1 + $0x100] sm:$0xf]
    %v129 = vld [vmem:[%s1 + $0x104] sm:$0xf]
    %v130 = vld [vmem:[%s1 + $0x108] sm:$0xf]
    %v131 = vld [vmem:[%s1 + $0x10c] sm:$0xf]
    %v132 = vld [vmem:[%s1 + $0x110] sm:$0xf]
    %v133 = vld [vmem:[%s1 + $0x114] sm:$0xf]
    %v134 = vld [vmem:[%s1 + $0x118] sm:$0xf]
    %v135 = vld [vmem:[%s1 + $0x11c] sm:$0xf]
    %v136 = vld [vmem:[%s1 + $0x120] sm:$0xf]
    %v137 = vld [vmem:[%s1 + $0x124] sm:$0xf]
    %v138 = vld [vmem:[%s1 + $0x128] sm:$0xf]
    %v139 = vld [vmem:[%s1 + $0x12c] sm:$0xf]
    %v140 = vld [vmem:[%s1 + $0x130] sm:$0xf]
    %v141 = vld [vmem:[%s1 + $0x134] sm:$0xf]
    %v142 = vld [vmem:[%s1 + $0x138] sm:$0xf]
    %v143 = vld [vmem:[%s1 + $0x13c] sm:$0xf]
    %v144 = vld [vmem:[%s1 + $0x140] sm:$0xf]
    %v145 = vld [vmem:[%s1 + $0x144] sm:$0xf]
    %v146 = vld [vmem:[%s1 + $0x148] sm:$0xf]
    %v147 = vld [vmem:[%s1 + $0x14c] sm:$0xf]
    %v148 = vld [vmem:[%s1 + $0x150] sm:$0xf]
    %v149 = vld [vmem:[%s1 + $0x154] sm:$0xf]
    %v150 = vld [vmem:[%s1 + $0x158] sm:$0xf]
    %v151 = vld [vmem:[%s1 + $0x15c] sm:$0xf]
    %v152 = vld [vmem:[%s1 + $0x160] sm:$0xf]
    %v153 = vld [vmem:[%s1 + $0x164] sm:$0xf]
    %v154 = vld [vmem:[%s1 + $0x168] sm:$0xf]
    %v155 = vld [vmem:[%s1 + $0x16c] sm:$0xf]
    %v156 = vld [vmem:[%s1 + $0x170] sm:$0xf]
    %v157 = vld [vmem:[%s1 + $0x174] sm:$0xf]
    %v158 = vld [vmem:[%s1 + $0x178] sm:$0xf]
    %v159 = vld [vmem:[%s1 + $0x17c] sm:$0xf]
    %v160 = vld [vmem:[%s1 + $0x180] sm:$0xf]
    %v161 = vld [vmem:[%s1 + $0x184] sm:$0xf]
    %v162 = vld [vmem:[%s2] sm:$0x1]
    %v164 = vperm.slane %v162, 0
    %v170 = vunpack.c.l.b16 %v60
    %v171 = vunpack.c.h.b16 %v60
    %v172 = vunpack.c.l.b16 %v61
    %v173 = vunpack.c.h.b16 %v61
    %v174 = vunpack.c.l.b16 %v62
    %v175 = vunpack.c.h.b16 %v62
    %v176 = vunpack.c.l.b16 %v63
    %v177 = vpack.c.b16 %v170, %v170
    %v178 = vpack.c.b16 %v171, %v171
    %v179 = vpack.c.b16 %v172, %v172
    %v180 = vpack.c.b16 %v173, %v173
    %v181 = vpack.c.b16 %v174, %v174
    %v182 = vpack.c.b16 %v175, %v175
    %v183 = vpack.c.b16 %v176, %v176
    %v288 = vunpack.c.l.b16 %v64
    %v289 = vunpack.c.l.b16 %v65
    %v290 = vunpack.c.l.b16 %v66
    %v291 = vunpack.c.l.b16 %v67
    %v292 = vunpack.c.l.b16 %v68
    %v293 = vunpack.c.l.b16 %v69
    %v294 = vunpack.c.l.b16 %v70
    %v295 = vunpack.c.l.b16 %v71
    %v296 = vunpack.c.l.b16 %v72
    %v297 = vunpack.c.l.b16 %v73
    %v298 = vunpack.c.l.b16 %v74
    %v299 = vunpack.c.l.b16 %v75
    %v300 = vunpack.c.l.b16 %v76
    %v301 = vunpack.c.l.b16 %v77
    %v302 = vunpack.c.l.b16 %v78
    %v303 = vunpack.c.l.b16 %v79
    %v304 = vunpack.c.l.b16 %v80
    %v305 = vunpack.c.l.b16 %v81
    %v306 = vunpack.c.l.b16 %v82
    %v307 = vunpack.c.l.b16 %v83
    %v308 = vunpack.c.l.b16 %v84
    %v309 = vunpack.c.l.b16 %v85
    %v310 = vunpack.c.l.b16 %v86
    %v311 = vunpack.c.l.b16 %v87
    %v312 = vunpack.c.l.b16 %v88
    %v313 = vunpack.c.l.b16 %v89
    %v314 = vunpack.c.l.b16 %v90
    %v315 = vunpack.c.l.b16 %v91
    %v316 = vunpack.c.l.b16 %v92
    %v317 = vunpack.c.l.b16 %v93
    %v318 = vunpack.c.l.b16 %v94
    %v319 = vunpack.c.l.b16 %v95
    %v320 = vunpack.c.l.b16 %v96
    %v321 = vunpack.c.l.b16 %v97
    %v322 = vunpack.c.l.b16 %v98
    %v323 = vunpack.c.l.b16 %v99
    %v324 = vunpack.c.l.b16 %v100
    %v325 = vunpack.c.l.b16 %v101
    %v326 = vunpack.c.l.b16 %v102
    %v327 = vunpack.c.l.b16 %v103
    %v328 = vunpack.c.l.b16 %v104
    %v329 = vunpack.c.l.b16 %v105
    %v330 = vunpack.c.l.b16 %v106
    %v331 = vunpack.c.l.b16 %v107
    %v332 = vunpack.c.l.b16 %v108
    %v333 = vunpack.c.l.b16 %v109
    %v334 = vunpack.c.l.b16 %v110
    %v335 = vunpack.c.l.b16 %v111
    %v336 = vunpack.c.l.b16 %v112
    %v337 = vunpack.c.l.b16 %v113
    %v338 = vunpack.c.l.b16 %v114
    %v339 = vunpack.c.l.b16 %v115
    %v340 = vunpack.c.l.b16 %v116
    %v341 = vunpack.c.l.b16 %v117
    %v342 = vunpack.c.l.b16 %v118
    %v343 = vunpack.c.l.b16 %v119
    %v344 = vunpack.c.l.b16 %v120
    %v345 = vunpack.c.l.b16 %v121
    %v346 = vunpack.c.l.b16 %v122
    %v347 = vunpack.c.l.b16 %v123
    %v348 = vunpack.c.l.b16 %v124
    %v349 = vunpack.c.l.b16 %v125
    %v350 = vunpack.c.l.b16 %v126
    %v351 = vunpack.c.l.b16 %v127
    %v352 = vunpack.c.l.b16 %v128
    %v353 = vunpack.c.l.b16 %v129
    %v354 = vunpack.c.l.b16 %v130
    %v355 = vunpack.c.l.b16 %v131
    %v356 = vunpack.c.l.b16 %v132
    %v357 = vunpack.c.l.b16 %v133
    %v358 = vunpack.c.l.b16 %v134
    %v359 = vunpack.c.l.b16 %v135
    %v360 = vunpack.c.l.b16 %v136
    %v361 = vunpack.c.l.b16 %v137
    %v362 = vunpack.c.l.b16 %v138
    %v363 = vunpack.c.l.b16 %v139
    %v364 = vunpack.c.l.b16 %v140
    %v365 = vunpack.c.l.b16 %v141
    %v366 = vunpack.c.l.b16 %v142
    %v367 = vunpack.c.l.b16 %v143
    %v368 = vunpack.c.l.b16 %v144
    %v369 = vunpack.c.l.b16 %v145
    %v370 = vunpack.c.l.b16 %v146
    %v371 = vunpack.c.l.b16 %v147
    %v372 = vunpack.c.l.b16 %v148
    %v373 = vunpack.c.l.b16 %v149
    %v374 = vunpack.c.l.b16 %v150
    %v375 = vunpack.c.l.b16 %v151
    %v376 = vunpack.c.l.b16 %v152
    %v377 = vunpack.c.l.b16 %v153
    %v378 = vunpack.c.l.b16 %v154
    %v379 = vunpack.c.l.b16 %v155
    %v380 = vunpack.c.l.b16 %v156
    %v381 = vunpack.c.l.b16 %v157
    %v382 = vunpack.c.l.b16 %v158
    %v383 = vunpack.c.l.b16 %v159
    %v384 = vunpack.c.l.b16 %v160
    %v385 = vunpack.c.l.b16 %v161
    %v386 = vpack.c.b16 %v289, %v288
    %v387 = vpack.c.b16 %v291, %v290
    %v388 = vpack.c.b16 %v293, %v292
    %v389 = vpack.c.b16 %v295, %v294
    %v390 = vpack.c.b16 %v297, %v296
    %v391 = vpack.c.b16 %v299, %v298
    %v392 = vpack.c.b16 %v301, %v300
    %v393 = vpack.c.b16 %v303, %v302
    %v394 = vpack.c.b16 %v305, %v304
    %v395 = vpack.c.b16 %v307, %v306
    %v396 = vpack.c.b16 %v309, %v308
    %v397 = vpack.c.b16 %v311, %v310
    %v398 = vpack.c.b16 %v313, %v312
    %v399 = vpack.c.b16 %v315, %v314
    %v400 = vpack.c.b16 %v317, %v316
    %v401 = vpack.c.b16 %v319, %v318
    %v402 = vpack.c.b16 %v321, %v320
    %v403 = vpack.c.b16 %v323, %v322
    %v404 = vpack.c.b16 %v325, %v324
    %v405 = vpack.c.b16 %v327, %v326
    %v406 = vpack.c.b16 %v329, %v328
    %v407 = vpack.c.b16 %v331, %v330
    %v408 = vpack.c.b16 %v333, %v332
    %v409 = vpack.c.b16 %v335, %v334
    %v410 = vpack.c.b16 %v337, %v336
    %v411 = vpack.c.b16 %v339, %v338
    %v412 = vpack.c.b16 %v341, %v340
    %v413 = vpack.c.b16 %v343, %v342
    %v414 = vpack.c.b16 %v345, %v344
    %v415 = vpack.c.b16 %v347, %v346
    %v416 = vpack.c.b16 %v349, %v348
    %v417 = vpack.c.b16 %v351, %v350
    %v418 = vpack.c.b16 %v353, %v352
    %v419 = vpack.c.b16 %v355, %v354
    %v420 = vpack.c.b16 %v357, %v356
    %v421 = vpack.c.b16 %v359, %v358
    %v422 = vpack.c.b16 %v361, %v360
    %v423 = vpack.c.b16 %v363, %v362
    %v424 = vpack.c.b16 %v365, %v364
    %v425 = vpack.c.b16 %v367, %v366
    %v426 = vpack.c.b16 %v369, %v368
    %v427 = vpack.c.b16 %v371, %v370
    %v428 = vpack.c.b16 %v373, %v372
    %v429 = vpack.c.b16 %v375, %v374
    %v430 = vpack.c.b16 %v377, %v376
    %v431 = vpack.c.b16 %v379, %v378
    %v432 = vpack.c.b16 %v381, %v380
    %v433 = vpack.c.b16 %v383, %v382
    %v434 = vpack.c.b16 %v385, %v384
    %vm484 = vcmask 130048
    %v486 = vsel %vm484, %v183, 0
    %488 = vmatpush.bf16.msra.mxu0 %v393
    %489 = vmatpush.bf16.msra.mxu0 %v392
    %490 = vmatpush.bf16.msra.mxu0 %v391
    %491 = vmatpush.bf16.msra.mxu0 %v390
    %492 = vmatpush.bf16.msra.mxu0 %v389
    %493 = vmatpush.bf16.msra.mxu0 %v388
    %494 = vmatpush.bf16.msra.mxu0 %v387
    %495 = vmatpush.bf16.msra.mxu0 %v386
    %496 = vmatmul.bf16.gmra.mxu0 %v177
    %v497 = vpop.f32.mrf.mxu0
    %v498 = vadd.f32 %v164, %v497
    %v499 = vpop.f32.mrf.mxu0
    %500 = vdwg.mxu0
    %501 = vmatpush.bf16.msra.mxu0 %v401
    %502 = vmatpush.bf16.msra.mxu0 %v400
    %503 = vmatpush.bf16.msra.mxu0 %v399
    %504 = vmatpush.bf16.msra.mxu0 %v398
    %505 = vmatpush.bf16.msra.mxu0 %v397
    %506 = vmatpush.bf16.msra.mxu0 %v396
    %507 = vmatpush.bf16.msra.mxu0 %v395
    %508 = vmatpush.bf16.msra.mxu0 %v394
    %509 = vmatmul.bf16.gmra.mxu0 %v178
    %v510 = vpop.f32.mrf.mxu0
    %v511 = vadd.f32 %v498, %v510
    %v512 = vpop.f32.mrf.mxu0
    %513 = vdwg.mxu0
    %514 = vmatpush.bf16.msra.mxu0 %v409
    %515 = vmatpush.bf16.msra.mxu0 %v408
    %516 = vmatpush.bf16.msra.mxu0 %v407
    %517 = vmatpush.bf16.msra.mxu0 %v406
    %518 = vmatpush.bf16.msra.mxu0 %v405
    %519 = vmatpush.bf16.msra.mxu0 %v404
    %520 = vmatpush.bf16.msra.mxu0 %v403
    %521 = vmatpush.bf16.msra.mxu0 %v402
    %522 = vmatmul.bf16.gmra.mxu0 %v179
    %v523 = vpop.f32.mrf.mxu0
    %v524 = vadd.f32 %v511, %v523
    %v525 = vpop.f32.mrf.mxu0
    %526 = vdwg.mxu0
    %527 = vmatpush.bf16.msra.mxu0 %v417
    %528 = vmatpush.bf16.msra.mxu0 %v416
    %529 = vmatpush.bf16.msra.mxu0 %v415
    %530 = vmatpush.bf16.msra.mxu0 %v414
    %531 = vmatpush.bf16.msra.mxu0 %v413
    %532 = vmatpush.bf16.msra.mxu0 %v412
    %533 = vmatpush.bf16.msra.mxu0 %v411
    %534 = vmatpush.bf16.msra.mxu0 %v410
    %535 = vmatmul.bf16.gmra.mxu0 %v180
    %v536 = vpop.f32.mrf.mxu0
    %v537 = vadd.f32 %v524, %v536
    %v538 = vpop.f32.mrf.mxu0
    %539 = vdwg.mxu0
    %540 = vmatpush.bf16.msra.mxu0 %v425
    %541 = vmatpush.bf16.msra.mxu0 %v424
    %542 = vmatpush.bf16.msra.mxu0 %v423
    %543 = vmatpush.bf16.msra.mxu0 %v422
    %544 = vmatpush.bf16.msra.mxu0 %v421
    %545 = vmatpush.bf16.msra.mxu0 %v420
    %546 = vmatpush.bf16.msra.mxu0 %v419
    %547 = vmatpush.bf16.msra.mxu0 %v418
    %548 = vmatmul.bf16.gmra.mxu0 %v181
    %v549 = vpop.f32.mrf.mxu0
    %v550 = vadd.f32 %v537, %v549
    %v551 = vpop.f32.mrf.mxu0
    %552 = vdwg.mxu0
    %553 = vmatpush.bf16.msra.mxu0 %v433
    %554 = vmatpush.bf16.msra.mxu0 %v432
    %555 = vmatpush.bf16.msra.mxu0 %v431
    %556 = vmatpush.bf16.msra.mxu0 %v430
    %557 = vmatpush.bf16.msra.mxu0 %v429
    %558 = vmatpush.bf16.msra.mxu0 %v428
    %559 = vmatpush.bf16.msra.mxu0 %v427
    %560 = vmatpush.bf16.msra.mxu0 %v426
    %561 = vmatmul.bf16.gmra.mxu0 %v182
    %v562 = vpop.f32.mrf.mxu0
    %v563 = vadd.f32 %v550, %v562
    %v564 = vpop.f32.mrf.mxu0
    %565 = vdwg.mxu0
    %566 = vmatpush.bf16.msra.mxu0 0
    %567 = vmatpush.bf16.msra.mxu0 0
    %568 = vmatpush.bf16.msra.mxu0 0
    %569 = vmatpush.bf16.msra.mxu0 0
    %570 = vmatpush.bf16.msra.mxu0 0
    %571 = vmatpush.bf16.msra.mxu0 0
    %572 = vmatpush.bf16.msra.mxu0 0
    %573 = vmatpush.bf16.msra.mxu0 %v434
    %574 = vmatmul.bf16.gmra.mxu0 %v486
    %v575 = vpop.f32.mrf.mxu0
    %v576 = vadd.f32 %v563, %v575
    %v577 = vpop.f32.mrf.mxu0
    %578 = vdwg.mxu0
    %v579 = vmax.f32 %v576, 0.0
    %v580 = vpack.c.bf16 %v579, %v579
    %v581 = vld [vmem:[#allocation2] sm:$0xff]
    %v582 = vld [vmem:[#allocation2 + $0x8] sm:$0xff]
    %v583 = vld [vmem:[#allocation2 + $0x10] sm:$0xff]
    %v584 = vld [vmem:[#allocation2 + $0x18] sm:$0xff]
    %v585 = vld [vmem:[#allocation2 + $0x20] sm:$0xff]
    %v586 = vld [vmem:[#allocation2 + $0x28] sm:$0xff]
    %v587 = vld [vmem:[#allocation2 + $0x30] sm:$0xff]
    %v588 = vld [vmem:[#allocation2 + $0x38] sm:$0xff]
    %v589 = vld [vmem:[#allocation2 + $0x40] sm:$0xff]
    %v590 = vld [vmem:[#allocation2 + $0x48] sm:$0xff]
    %v591 = vld [vmem:[#allocation2 + $0x50] sm:$0xff]
    %v592 = vld [vmem:[#allocation2 + $0x58] sm:$0xff]
    %v593 = vld [vmem:[#allocation2 + $0x60] sm:$0xff]
    %v594 = vld [vmem:[#allocation2 + $0x68] sm:$0xff]
    %v595 = vld [vmem:[#allocation2 + $0x70] sm:$0xff]
    %v596 = vld [vmem:[#allocation2 + $0x78] sm:$0xff]
    %v597 = vld [vmem:[#allocation2 + $0x80] sm:$0xff]
    %v598 = vld [vmem:[#allocation2 + $0x88] sm:$0xff]
    %v599 = vld [vmem:[#allocation2 + $0x90] sm:$0xff]
    %v600 = vld [vmem:[#allocation2 + $0x98] sm:$0xff]
    %v601 = vld [vmem:[#allocation2 + $0xa0] sm:$0xff]
    %v602 = vld [vmem:[#allocation2 + $0xa8] sm:$0xff]
    %v603 = vld [vmem:[#allocation2 + $0xb0] sm:$0xff]
    %v604 = vld [vmem:[#allocation2 + $0xb8] sm:$0xff]
    %v605 = vld [vmem:[#allocation2 + $0xc0] sm:$0xff]
    %v606 = vld [vmem:[#allocation2 + $0xc8] sm:$0xff]
    %v607 = vld [vmem:[#allocation2 + $0xd0] sm:$0xff]
    %v608 = vld [vmem:[#allocation2 + $0xd8] sm:$0xff]
    %v609 = vld [vmem:[#allocation2 + $0xe0] sm:$0xff]
    %v610 = vld [vmem:[#allocation2 + $0xe8] sm:$0xff]
    %v611 = vld [vmem:[#allocation2 + $0xf0] sm:$0xff]
    %v612 = vld [vmem:[#allocation2 + $0xf8] sm:$0xff]
    %v613 = vld [vmem:[%s4] sm:$0xf]
    %v615 = vperm.slane %v613, 0
    %v616 = vperm.slane %v613, 1
    %v617 = vperm.slane %v613, 2
    %v618 = vperm.slane %v613, 3
    %v655 = vunpack.c.l.b16 %v581
    %v656 = vunpack.c.h.b16 %v581
    %v657 = vunpack.c.l.b16 %v582
    %v658 = vunpack.c.h.b16 %v582
    %v659 = vunpack.c.l.b16 %v583
    %v660 = vunpack.c.h.b16 %v583
    %v661 = vunpack.c.l.b16 %v584
    %v662 = vunpack.c.h.b16 %v584
    %v663 = vunpack.c.l.b16 %v585
    %v664 = vunpack.c.h.b16 %v585
    %v665 = vunpack.c.l.b16 %v586
    %v666 = vunpack.c.h.b16 %v586
    %v667 = vunpack.c.l.b16 %v587
    %v668 = vunpack.c.h.b16 %v587
    %v669 = vunpack.c.l.b16 %v588
    %v670 = vunpack.c.h.b16 %v588
    %v671 = vunpack.c.l.b16 %v589
    %v672 = vunpack.c.h.b16 %v589
    %v673 = vunpack.c.l.b16 %v590
    %v674 = vunpack.c.h.b16 %v590
    %v675 = vunpack.c.l.b16 %v591
    %v676 = vunpack.c.h.b16 %v591
    %v677 = vunpack.c.l.b16 %v592
    %v678 = vunpack.c.h.b16 %v592
    %v679 = vunpack.c.l.b16 %v593
    %v680 = vunpack.c.h.b16 %v593
    %v681 = vunpack.c.l.b16 %v594
    %v682 = vunpack.c.h.b16 %v594
    %v683 = vunpack.c.l.b16 %v595
    %v684 = vunpack.c.h.b16 %v595
    %v685 = vunpack.c.l.b16 %v596
    %v686 = vunpack.c.h.b16 %v596
    %v687 = vunpack.c.l.b16 %v597
    %v688 = vunpack.c.h.b16 %v597
    %v689 = vunpack.c.l.b16 %v598
    %v690 = vunpack.c.h.b16 %v598
    %v691 = vunpack.c.l.b16 %v599
    %v692 = vunpack.c.h.b16 %v599
    %v693 = vunpack.c.l.b16 %v600
    %v694 = vunpack.c.h.b16 %v600
    %v695 = vunpack.c.l.b16 %v601
    %v696 = vunpack.c.h.b16 %v601
    %v697 = vunpack.c.l.b16 %v602
    %v698 = vunpack.c.h.b16 %v602
    %v699 = vunpack.c.l.b16 %v603
    %v700 = vunpack.c.h.b16 %v603
    %v701 = vunpack.c.l.b16 %v604
    %v702 = vunpack.c.h.b16 %v604
    %v703 = vunpack.c.l.b16 %v605
    %v704 = vunpack.c.h.b16 %v605
    %v705 = vunpack.c.l.b16 %v606
    %v706 = vunpack.c.h.b16 %v606
    %v707 = vunpack.c.l.b16 %v607
    %v708 = vunpack.c.h.b16 %v607
    %v709 = vunpack.c.l.b16 %v608
    %v710 = vunpack.c.h.b16 %v608
    %v711 = vunpack.c.l.b16 %v609
    %v712 = vunpack.c.h.b16 %v609
    %v713 = vunpack.c.l.b16 %v610
    %v714 = vunpack.c.h.b16 %v610
    %v715 = vunpack.c.l.b16 %v611
    %v716 = vunpack.c.h.b16 %v611
    %v717 = vunpack.c.l.b16 %v612
    %v718 = vunpack.c.h.b16 %v612
    %v719 = vpack.c.b16 %v659, %v655
    %v720 = vpack.c.b16 %v660, %v656
    %v721 = vpack.c.b16 %v661, %v657
    %v722 = vpack.c.b16 %v662, %v658
    %v723 = vpack.c.b16 %v667, %v663
    %v724 = vpack.c.b16 %v668, %v664
    %v725 = vpack.c.b16 %v669, %v665
    %v726 = vpack.c.b16 %v670, %v666
    %v727 = vpack.c.b16 %v675, %v671
    %v728 = vpack.c.b16 %v676, %v672
    %v729 = vpack.c.b16 %v677, %v673
    %v730 = vpack.c.b16 %v678, %v674
    %v731 = vpack.c.b16 %v683, %v679
    %v732 = vpack.c.b16 %v684, %v680
    %v733 = vpack.c.b16 %v685, %v681
    %v734 = vpack.c.b16 %v686, %v682
    %v735 = vpack.c.b16 %v691, %v687
    %v736 = vpack.c.b16 %v692, %v688
    %v737 = vpack.c.b16 %v693, %v689
    %v738 = vpack.c.b16 %v694, %v690
    %v739 = vpack.c.b16 %v699, %v695
    %v740 = vpack.c.b16 %v700, %v696
    %v741 = vpack.c.b16 %v701, %v697
    %v742 = vpack.c.b16 %v702, %v698
    %v743 = vpack.c.b16 %v707, %v703
    %v744 = vpack.c.b16 %v708, %v704
    %v745 = vpack.c.b16 %v709, %v705
    %v746 = vpack.c.b16 %v710, %v706
    %v747 = vpack.c.b16 %v715, %v711
    %v748 = vpack.c.b16 %v716, %v712
    %v749 = vpack.c.b16 %v717, %v713
    %v750 = vpack.c.b16 %v718, %v714
    %783 = vmatpush.bf16.msra.mxu0 %v747
    %784 = vmatpush.bf16.msra.mxu0 %v743
    %785 = vmatpush.bf16.msra.mxu0 %v739
    %786 = vmatpush.bf16.msra.mxu0 %v735
    %787 = vmatpush.bf16.msra.mxu0 %v731
    %788 = vmatpush.bf16.msra.mxu0 %v727
    %789 = vmatpush.bf16.msra.mxu0 %v723
    %790 = vmatpush.bf16.msra.mxu0 %v719
    %791 = vmatmul.bf16.gmra.mxu0 %v580
    %v792 = vpop.f32.mrf.mxu0
    %v793 = vadd.f32 %v615, %v792
    %v794 = vpop.f32.mrf.mxu0
    %795 = vdwg.mxu0
    %796 = vmatpush.bf16.msra.mxu0 %v748
    %797 = vmatpush.bf16.msra.mxu0 %v744
    %798 = vmatpush.bf16.msra.mxu0 %v740
    %799 = vmatpush.bf16.msra.mxu0 %v736
    %800 = vmatpush.bf16.msra.mxu0 %v732
    %801 = vmatpush.bf16.msra.mxu0 %v728
    %802 = vmatpush.bf16.msra.mxu0 %v724
    %803 = vmatpush.bf16.msra.mxu0 %v720
    %804 = vmatmul.bf16.gmra.mxu0 %v580
    %v805 = vpop.f32.mrf.mxu0
    %v806 = vadd.f32 %v616, %v805
    %v807 = vpop.f32.mrf.mxu0
    %808 = vdwg.mxu0
    %809 = vmatpush.bf16.msra.mxu0 %v749
    %810 = vmatpush.bf16.msra.mxu0 %v745
    %811 = vmatpush.bf16.msra.mxu0 %v741
    %812 = vmatpush.bf16.msra.mxu0 %v737
    %813 = vmatpush.bf16.msra.mxu0 %v733
    %814 = vmatpush.bf16.msra.mxu0 %v729
    %815 = vmatpush.bf16.msra.mxu0 %v725
    %816 = vmatpush.bf16.msra.mxu0 %v721
    %817 = vmatmul.bf16.gmra.mxu0 %v580
    %v818 = vpop.f32.mrf.mxu0
    %v819 = vadd.f32 %v617, %v818
    %v820 = vpop.f32.mrf.mxu0
    %821 = vdwg.mxu0
    %822 = vmatpush.bf16.msra.mxu0 %v750
    %823 = vmatpush.bf16.msra.mxu0 %v746
    %824 = vmatpush.bf16.msra.mxu0 %v742
    %825 = vmatpush.bf16.msra.mxu0 %v738
    %826 = vmatpush.bf16.msra.mxu0 %v734
    %827 = vmatpush.bf16.msra.mxu0 %v730
    %828 = vmatpush.bf16.msra.mxu0 %v726
    %829 = vmatpush.bf16.msra.mxu0 %v722
    %830 = vmatmul.bf16.gmra.mxu0 %v580
    %v831 = vpop.f32.mrf.mxu0
    %v832 = vadd.f32 %v618, %v831
    %v833 = vpop.f32.mrf.mxu0
    %834 = vdwg.mxu0
    %v835 = vmax.f32 %v793, 0.0
    %v836 = vmax.f32 %v806, 0.0
    %v837 = vmax.f32 %v819, 0.0
    %v838 = vmax.f32 %v832, 0.0
    %v839 = vpack.c.bf16 %v835, %v835
    %v840 = vpack.c.bf16 %v836, %v836
    %v841 = vpack.c.bf16 %v837, %v837
    %v842 = vpack.c.bf16 %v838, %v838
    %v843 = vld [vmem:[#allocation5] sm:$0xf]
    %v844 = vld [vmem:[#allocation5 + $0x4] sm:$0xf]
    %v845 = vld [vmem:[#allocation5 + $0x8] sm:$0xf]
    %v846 = vld [vmem:[#allocation5 + $0xc] sm:$0xf]
    %v847 = vld [vmem:[#allocation5 + $0x10] sm:$0xf]
    %v848 = vld [vmem:[#allocation5 + $0x14] sm:$0xf]
    %v849 = vld [vmem:[#allocation5 + $0x18] sm:$0xf]
    %v850 = vld [vmem:[#allocation5 + $0x1c] sm:$0xf]
    %v851 = vld [vmem:[#allocation5 + $0x20] sm:$0xf]
    %v852 = vld [vmem:[#allocation5 + $0x24] sm:$0xf]
    %v853 = vld [vmem:[#allocation5 + $0x28] sm:$0xf]
    %v854 = vld [vmem:[#allocation5 + $0x2c] sm:$0xf]
    %v855 = vld [vmem:[#allocation5 + $0x30] sm:$0xf]
    %v856 = vld [vmem:[#allocation5 + $0x34] sm:$0xf]
    %v857 = vld [vmem:[#allocation5 + $0x38] sm:$0xf]
    %v858 = vld [vmem:[#allocation5 + $0x3c] sm:$0xf]
    %v859 = vld [vmem:[#allocation5 + $0x40] sm:$0xf]
    %v860 = vld [vmem:[#allocation5 + $0x44] sm:$0xf]
    %v861 = vld [vmem:[#allocation5 + $0x48] sm:$0xf]
    %v862 = vld [vmem:[#allocation5 + $0x4c] sm:$0xf]
    %v863 = vld [vmem:[#allocation5 + $0x50] sm:$0xf]
    %v864 = vld [vmem:[#allocation5 + $0x54] sm:$0xf]
    %v865 = vld [vmem:[#allocation5 + $0x58] sm:$0xf]
    %v866 = vld [vmem:[#allocation5 + $0x5c] sm:$0xf]
    %v867 = vld [vmem:[#allocation5 + $0x60] sm:$0xf]
    %v868 = vld [vmem:[#allocation5 + $0x64] sm:$0xf]
    %v869 = vld [vmem:[#allocation5 + $0x68] sm:$0xf]
    %v870 = vld [vmem:[#allocation5 + $0x6c] sm:$0xf]
    %v871 = vld [vmem:[#allocation5 + $0x70] sm:$0xf]
    %v872 = vld [vmem:[#allocation5 + $0x74] sm:$0xf]
    %v873 = vld [vmem:[#allocation5 + $0x78] sm:$0xf]
    %v874 = vld [vmem:[#allocation5 + $0x7c] sm:$0xf]
    %v875 = vld [vmem:[#allocation5 + $0x80] sm:$0xf]
    %v876 = vld [vmem:[#allocation5 + $0x84] sm:$0xf]
    %v877 = vld [vmem:[#allocation5 + $0x88] sm:$0xf]
    %v878 = vld [vmem:[#allocation5 + $0x8c] sm:$0xf]
    %v879 = vld [vmem:[#allocation5 + $0x90] sm:$0xf]
    %v880 = vld [vmem:[#allocation5 + $0x94] sm:$0xf]
    %v881 = vld [vmem:[#allocation5 + $0x98] sm:$0xf]
    %v882 = vld [vmem:[#allocation5 + $0x9c] sm:$0xf]
    %v883 = vld [vmem:[#allocation5 + $0xa0] sm:$0xf]
    %v884 = vld [vmem:[#allocation5 + $0xa4] sm:$0xf]
    %v885 = vld [vmem:[#allocation5 + $0xa8] sm:$0xf]
    %v886 = vld [vmem:[#allocation5 + $0xac] sm:$0xf]
    %v887 = vld [vmem:[#allocation5 + $0xb0] sm:$0xf]
    %v888 = vld [vmem:[#allocation5 + $0xb4] sm:$0xf]
    %v889 = vld [vmem:[#allocation5 + $0xb8] sm:$0xf]
    %v890 = vld [vmem:[#allocation5 + $0xbc] sm:$0xf]
    %v891 = vld [vmem:[#allocation5 + $0xc0] sm:$0xf]
    %v892 = vld [vmem:[#allocation5 + $0xc4] sm:$0xf]
    %v893 = vld [vmem:[#allocation5 + $0xc8] sm:$0xf]
    %v894 = vld [vmem:[#allocation5 + $0xcc] sm:$0xf]
    %v895 = vld [vmem:[#allocation5 + $0xd0] sm:$0xf]
    %v896 = vld [vmem:[#allocation5 + $0xd4] sm:$0xf]
    %v897 = vld [vmem:[#allocation5 + $0xd8] sm:$0xf]
    %v898 = vld [vmem:[#allocation5 + $0xdc] sm:$0xf]
    %v899 = vld [vmem:[#allocation5 + $0xe0] sm:$0xf]
    %v900 = vld [vmem:[#allocation5 + $0xe4] sm:$0xf]
    %v901 = vld [vmem:[#allocation5 + $0xe8] sm:$0xf]
    %v902 = vld [vmem:[#allocation5 + $0xec] sm:$0xf]
    %v903 = vld [vmem:[#allocation5 + $0xf0] sm:$0xf]
    %v904 = vld [vmem:[#allocation5 + $0xf4] sm:$0xf]
    %v905 = vld [vmem:[#allocation5 + $0xf8] sm:$0xf]
    %v906 = vld [vmem:[#allocation5 + $0xfc] sm:$0xf]
    %v907 = vld [vmem:[%s6] sm:$0x1]
    %v909 = vperm.slane %v907, 0
    %v975 = vunpack.c.l.b16 %v843
    %v976 = vunpack.c.l.b16 %v844
    %v977 = vunpack.c.l.b16 %v845
    %v978 = vunpack.c.l.b16 %v846
    %v979 = vunpack.c.l.b16 %v847
    %v980 = vunpack.c.l.b16 %v848
    %v981 = vunpack.c.l.b16 %v849
    %v982 = vunpack.c.l.b16 %v850
    %v983 = vunpack.c.l.b16 %v851
    %v984 = vunpack.c.l.b16 %v852
    %v985 = vunpack.c.l.b16 %v853
    %v986 = vunpack.c.l.b16 %v854
    %v987 = vunpack.c.l.b16 %v855
    %v988 = vunpack.c.l.b16 %v856
    %v989 = vunpack.c.l.b16 %v857
    %v990 = vunpack.c.l.b16 %v858
    %v991 = vunpack.c.l.b16 %v859
    %v992 = vunpack.c.l.b16 %v860
    %v993 = vunpack.c.l.b16 %v861
    %v994 = vunpack.c.l.b16 %v862
    %v995 = vunpack.c.l.b16 %v863
    %v996 = vunpack.c.l.b16 %v864
    %v997 = vunpack.c.l.b16 %v865
    %v998 = vunpack.c.l.b16 %v866
    %v999 = vunpack.c.l.b16 %v867
    %v1000 = vunpack.c.l.b16 %v868
    %v1001 = vunpack.c.l.b16 %v869
    %v1002 = vunpack.c.l.b16 %v870
    %v1003 = vunpack.c.l.b16 %v871
    %v1004 = vunpack.c.l.b16 %v872
    %v1005 = vunpack.c.l.b16 %v873
    %v1006 = vunpack.c.l.b16 %v874
    %v1007 = vunpack.c.l.b16 %v875
    %v1008 = vunpack.c.l.b16 %v876
    %v1009 = vunpack.c.l.b16 %v877
    %v1010 = vunpack.c.l.b16 %v878
    %v1011 = vunpack.c.l.b16 %v879
    %v1012 = vunpack.c.l.b16 %v880
    %v1013 = vunpack.c.l.b16 %v881
    %v1014 = vunpack.c.l.b16 %v882
    %v1015 = vunpack.c.l.b16 %v883
    %v1016 = vunpack.c.l.b16 %v884
    %v1017 = vunpack.c.l.b16 %v885
    %v1018 = vunpack.c.l.b16 %v886
    %v1019 = vunpack.c.l.b16 %v887
    %v1020 = vunpack.c.l.b16 %v888
    %v1021 = vunpack.c.l.b16 %v889
    %v1022 = vunpack.c.l.b16 %v890
    %v1023 = vunpack.c.l.b16 %v891
    %v1024 = vunpack.c.l.b16 %v892
    %v1025 = vunpack.c.l.b16 %v893
    %v1026 = vunpack.c.l.b16 %v894
    %v1027 = vunpack.c.l.b16 %v895
    %v1028 = vunpack.c.l.b16 %v896
    %v1029 = vunpack.c.l.b16 %v897
    %v1030 = vunpack.c.l.b16 %v898
    %v1031 = vunpack.c.l.b16 %v899
    %v1032 = vunpack.c.l.b16 %v900
    %v1033 = vunpack.c.l.b16 %v901
    %v1034 = vunpack.c.l.b16 %v902
    %v1035 = vunpack.c.l.b16 %v903
    %v1036 = vunpack.c.l.b16 %v904
    %v1037 = vunpack.c.l.b16 %v905
    %v1038 = vunpack.c.l.b16 %v906
    %v1039 = vpack.c.b16 %v976, %v975
    %v1040 = vpack.c.b16 %v978, %v977
    %v1041 = vpack.c.b16 %v980, %v979
    %v1042 = vpack.c.b16 %v982, %v981
    %v1043 = vpack.c.b16 %v984, %v983
    %v1044 = vpack.c.b16 %v986, %v985
    %v1045 = vpack.c.b16 %v988, %v987
    %v1046 = vpack.c.b16 %v990, %v989
    %v1047 = vpack.c.b16 %v992, %v991
    %v1048 = vpack.c.b16 %v994, %v993
    %v1049 = vpack.c.b16 %v996, %v995
    %v1050 = vpack.c.b16 %v998, %v997
    %v1051 = vpack.c.b16 %v1000, %v999
    %v1052 = vpack.c.b16 %v1002, %v1001
    %v1053 = vpack.c.b16 %v1004, %v1003
    %v1054 = vpack.c.b16 %v1006, %v1005
    %v1055 = vpack.c.b16 %v1008, %v1007
    %v1056 = vpack.c.b16 %v1010, %v1009
    %v1057 = vpack.c.b16 %v1012, %v1011
    %v1058 = vpack.c.b16 %v1014, %v1013
    %v1059 = vpack.c.b16 %v1016, %v1015
    %v1060 = vpack.c.b16 %v1018, %v1017
    %v1061 = vpack.c.b16 %v1020, %v1019
    %v1062 = vpack.c.b16 %v1022, %v1021
    %v1063 = vpack.c.b16 %v1024, %v1023
    %v1064 = vpack.c.b16 %v1026, %v1025
    %v1065 = vpack.c.b16 %v1028, %v1027
    %v1066 = vpack.c.b16 %v1030, %v1029
    %v1067 = vpack.c.b16 %v1032, %v1031
    %v1068 = vpack.c.b16 %v1034, %v1033
    %v1069 = vpack.c.b16 %v1036, %v1035
    %v1070 = vpack.c.b16 %v1038, %v1037
    %1103 = vmatpush.bf16.msra.mxu0 %v1046
    %1104 = vmatpush.bf16.msra.mxu0 %v1045
    %1105 = vmatpush.bf16.msra.mxu0 %v1044
    %1106 = vmatpush.bf16.msra.mxu0 %v1043
    %1107 = vmatpush.bf16.msra.mxu0 %v1042
    %1108 = vmatpush.bf16.msra.mxu0 %v1041
    %1109 = vmatpush.bf16.msra.mxu0 %v1040
    %1110 = vmatpush.bf16.msra.mxu0 %v1039
    %1111 = vmatmul.bf16.gmra.mxu0 %v839
    %v1112 = vpop.f32.mrf.mxu0
    %v1113 = vadd.f32 %v909, %v1112
    %v1114 = vpop.f32.mrf.mxu0
    %1115 = vdwg.mxu0
    %1116 = vmatpush.bf16.msra.mxu0 %v1054
    %1117 = vmatpush.bf16.msra.mxu0 %v1053
    %1118 = vmatpush.bf16.msra.mxu0 %v1052
    %1119 = vmatpush.bf16.msra.mxu0 %v1051
    %1120 = vmatpush.bf16.msra.mxu0 %v1050
    %1121 = vmatpush.bf16.msra.mxu0 %v1049
    %1122 = vmatpush.bf16.msra.mxu0 %v1048
    %1123 = vmatpush.bf16.msra.mxu0 %v1047
    %1124 = vmatmul.bf16.gmra.mxu0 %v840
    %v1125 = vpop.f32.mrf.mxu0
    %v1126 = vadd.f32 %v1113, %v1125
    %v1127 = vpop.f32.mrf.mxu0
    %1128 = vdwg.mxu0
    %1129 = vmatpush.bf16.msra.mxu0 %v1062
    %1130 = vmatpush.bf16.msra.mxu0 %v1061
    %1131 = vmatpush.bf16.msra.mxu0 %v1060
    %1132 = vmatpush.bf16.msra.mxu0 %v1059
    %1133 = vmatpush.bf16.msra.mxu0 %v1058
    %1134 = vmatpush.bf16.msra.mxu0 %v1057
    %1135 = vmatpush.bf16.msra.mxu0 %v1056
    %1136 = vmatpush.bf16.msra.mxu0 %v1055
    %1137 = vmatmul.bf16.gmra.mxu0 %v841
    %v1138 = vpop.f32.mrf.mxu0
    %v1139 = vadd.f32 %v1126, %v1138
    %v1140 = vpop.f32.mrf.mxu0
    %1141 = vdwg.mxu0
    %1142 = vmatpush.bf16.msra.mxu0 %v1070
    %1143 = vmatpush.bf16.msra.mxu0 %v1069
    %1144 = vmatpush.bf16.msra.mxu0 %v1068
    %1145 = vmatpush.bf16.msra.mxu0 %v1067
    %1146 = vmatpush.bf16.msra.mxu0 %v1066
    %1147 = vmatpush.bf16.msra.mxu0 %v1065
    %1148 = vmatpush.bf16.msra.mxu0 %v1064
    %1149 = vmatpush.bf16.msra.mxu0 %v1063
    %1150 = vmatmul.bf16.gmra.mxu0 %v842
    %v1151 = vpop.f32.mrf.mxu0
    %v1152 = vadd.f32 %v1139, %v1151
    %v1153 = vpop.f32.mrf.mxu0
    %1154 = vdwg.mxu0
    %1155 = vst [vmem:[#allocation7] sm:$0xff] %v1152
    // Predicated region
    $region38: #{neural_network_forward.1} parent=1 // pred_check
      _
    $region39: #{neural_network_forward.1} parent=1 // pred_check_branch
      %1157 = sbr.rel (0) target = $region41
    $region40: #{neural_network_forward.1} parent=1 // pred_region
      %1159 = vsyncadd [#allocation4], 0
      %s1161 = sshll.u32 [#allocation7], 4
      %s1162 = int_to_ptr.vmem [resolvable:$true] %s1161
      %s1163 = sshll.u32 %s7, 4
      %s1164 = int_to_ptr.hbm [resolvable:$true] %s1163
      %1166 = dma.vmem_to_hbm [thread:$0]  %s1162, 128, %s1164, [#allocation4]
    $region41: #{neural_network_forward.1} parent=1 // pred_fallthru
      _
    // Predicated region
    $region42: #{neural_network_forward.1} parent=1 // pred_check
      _
    $region43: #{neural_network_forward.1} parent=1 // pred_check_branch
      %1168 = sbr.rel (0) target = $region45
    $region44: #{neural_network_forward.1} parent=1 // pred_region
      %1170 = dma.done [#allocation4], 128
    $region45: #{neural_network_forward.1} parent=1 // pred_fallthru
      _
    %1171 = vsyncpa [#allocation3], 1
    %1172 = vsyncpa [#allocation6], 1
    %1173 = vsyncpa [#allocation4], 1

</llo_original>
